<compile_context>
chip_gen: v6e
topology: v6e:2x2x1
jax: 0.10.0
libtpu: 0.0.40
codegen_flags: <defaults>
</compile_context>

<pallas_src>
import math
import functools

import jax
import jax.numpy as jnp
import numpy as np
from jax.experimental import pallas as pl
from jax.experimental.pallas import tpu as pltpu


def _i32const(v: int) -> int:
    """Two's-complement reinterpretation of a 32-bit hex constant as int32."""
    v &= 0xFFFFFFFF
    return v - (1 << 32) if v >= (1 << 31) else v


_SEED_MIX = _i32const(0x9E3779B9)
_MURMUR_C1 = _i32const(0x85EBCA6B)
_MURMUR_C2 = _i32const(0xC2B2AE35)


def make_positional_encoding(d_model: int, max_len: int) -> jnp.ndarray:
    """Deterministic 'parameter' init, identical to the PyTorch __init__."""
    position = np.arange(0, max_len, dtype=np.float32)[:, None]          # (L, 1)
    div_term = np.exp(np.arange(0, d_model, 2, dtype=np.float32)
                      * (-math.log(10000.0) / d_model))                  # (D/2,)
    pe = np.zeros((max_len, d_model), dtype=np.float32)
    pe[:, 0::2] = np.sin(position * div_term)
    pe[:, 1::2] = np.cos(position * div_term)
    pe = pe[:, None, :]                                                  # (L, 1, D)
    return jnp.asarray(pe)


def _srl32(x, k: int):
    """Logical right shift of an int32 vector (arithmetic shift + mask)."""
    return (x >> k) & jnp.int32((1 << (32 - k)) - 1)


def _pos_enc_kernel(seed_ref, x_ref, pe_ref, o_ref, *, batch, p, training):
    pe_row = pe_ref[...]                                     # (bs, D)
    if batch > 1:
        # Broadcast pe over batch along the lane axis: out[:, b*D+d] uses pe[:, d].
        pe_row = jnp.concatenate([pe_row] * batch, axis=-1)  # (bs, B*D)
    y = x_ref[...] + pe_row                                  # (bs, B*D)

    if training and p > 0.0:
        bs, bd = y.shape
        # Absolute element id == flat index of (s, b, d) in the original
        # (S, B, D) tensor, so the mask does not depend on block_s / grid.
        rows = jax.lax.broadcasted_iota(jnp.int32, (bs, bd), 0)
        cols = jax.lax.broadcasted_iota(jnp.int32, (bs, bd), 1)
        flat = (rows + pl.program_id(0) * bs) * bd + cols
        # Murmur3-style finalizer; int32 wrap-around == uint32 arithmetic.
        h = flat ^ (seed_ref[0] * jnp.int32(_SEED_MIX))
        h = (h ^ _srl32(h, 16)) * jnp.int32(_MURMUR_C1)
        h = (h ^ _srl32(h, 13)) * jnp.int32(_MURMUR_C2)
        h = h ^ _srl32(h, 16)
        # Keep with probability 1-p: 24 random bits vs. integer threshold
        # (no uint->float conversion on the hot path).
        thresh = jnp.int32(int(round(p * (1 << 24))))
        keep = _srl32(h, 8) >= thresh
        y = jnp.where(keep, y * jnp.float32(1.0 / (1.0 - p)), jnp.float32(0.0))

    o_ref[...] = y.astype(o_ref.dtype)


def _pick_block_s(S: int, row_bytes: int, target_bytes: int) -> int:
    """Largest multiple-of-8 row count whose x tile is ~<= target_bytes."""
    bs = target_bytes // max(row_bytes, 1)
    if bs >= S:
        return S                       # single block covers the whole array
    bs = max(8, (bs // 8) * 8)         # sublane-aligned second-minor block dim
    return min(bs, S)


def positional_encoding_forward(x, pe, *, dropout_p=0.1, training=False,
                                seed=0, block_s=None,
                                x_tile_bytes=2 * 1024 * 1024,
                                vmem_limit_bytes=32 * 1024 * 1024):
    """x: (S, B, D); pe: (max_len, 1, D).  Returns (S, B, D)."""
    S, B, D = x.shape
    BD = B * D

    # Lane-dense 2D view (layout plumbing only): output last dim = B*D.
    x2 = x.reshape(S, BD)
    pe2 = pe[:S, 0, :]                 # squeeze -> (S, D); no (bs,1,D) padded tile

    if block_s is None:
        block_s = _pick_block_s(S, BD * x.dtype.itemsize, x_tile_bytes)
    block_s = int(min(block_s, S))
    grid = (pl.cdiv(S, block_s),)

    kernel = functools.partial(_pos_enc_kernel, batch=B, p=float(dropout_p),
                               training=bool(training))
    seed_arr = jnp.asarray([seed], dtype=jnp.int32)

    out2 = pl.pallas_call(
        kernel,
        out_shape=jax.ShapeDtypeStruct((S, BD), x.dtype),
        grid_spec=pltpu.PrefetchScalarGridSpec(
            num_scalar_prefetch=1,                             # seed -> SMEM
            grid=grid,
            in_specs=[
                pl.BlockSpec((block_s, BD), lambda i, seed: (i, 0)),
                pl.BlockSpec((block_s, D), lambda i, seed: (i, 0)),
            ],
            out_specs=pl.BlockSpec((block_s, BD), lambda i, seed: (i, 0)),
        ),
        compiler_params=pltpu.CompilerParams(
            dimension_semantics=("parallel",),   # independent seq blocks; v7x megacore
            vmem_limit_bytes=vmem_limit_bytes,   # explicit (v5e default is 16 MiB)
        ),
    )(seed_arr, x2, pe2)
    return out2.reshape(S, B, D)


if __name__ == "__main__":
    S, B, D = 8, 2, 32          # seq, batch, d_model
    MAX_LEN = 64
    key = jax.random.PRNGKey(0)
    x = jax.random.normal(key, (S, B, D), dtype=jnp.float32)

    pe = make_positional_encoding(D, MAX_LEN)

    # Eval-mode forward (dropout is identity), matching module.eval().
    out = positional_encoding_forward(x, pe, dropout_p=0.1, training=False)
    out = jax.block_until_ready(out)

    ref = x + pe[:S]
    np.testing.assert_allclose(np.asarray(out), np.asarray(ref),
                               rtol=1e-6, atol=1e-6)

    # Training-mode forward (inverted dropout): every element must be either
    # exactly 0 (dropped) or (x + pe) / (1 - p) (kept), and the mask must be
    # non-degenerate.
    p = 0.1
    out_t = positional_encoding_forward(x, pe, dropout_p=p, training=True,
                                        seed=123)
    out_t = np.asarray(jax.block_until_ready(out_t))
    scaled = np.asarray(ref) / (1.0 - p)
    kept = out_t != 0.0
    np.testing.assert_allclose(out_t[kept], scaled[kept], rtol=1e-5, atol=1e-6)
    assert 0 < kept.sum() < out_t.size, "dropout mask degenerate"

    print("KERNEL_OK")
</pallas_src>

<mosaic_0001>
module attributes {stable_mosaic.version = 11 : i64} {
  func.func @_pos_enc_kernel(%arg0: i32, %arg1: memref<1xi32, #tpu.memory_space<smem>>, %arg2: memref<8x64xf32, #tpu.memory_space<vmem>>, %arg3: memref<8x32xf32, #tpu.memory_space<vmem>>, %arg4: memref<8x64xf32, #tpu.memory_space<vmem>>) attributes {dimension_semantics = [#tpu.dimension_semantics<parallel>], iteration_bounds = array<i64: 1>, scalar_prefetch = 1 : i64, scratch_operands = 0 : i64, tpu.core_type = #tpu.core_type<tc>, window_params = [{transform_indices = @transform_0, window_bounds = array<i64: 8, 64>}, {transform_indices = @transform_1, window_bounds = array<i64: 8, 32>}, {transform_indices = @transform_2, window_bounds = array<i64: 8, 64>}]} {
    %c0 = arith.constant 0 : index
    %c0_0 = arith.constant 0 : index
    %0 = vector.load %arg3[%c0, %c0_0] : memref<8x32xf32, #tpu.memory_space<vmem>>, vector<8x32xf32>
    %1 = tpu.concatenate %0, %0 in 1 : vector<8x32xf32>, vector<8x32xf32> -> vector<8x64xf32>
    %c0_1 = arith.constant 0 : index
    %c0_2 = arith.constant 0 : index
    %2 = vector.load %arg2[%c0_1, %c0_2] : memref<8x64xf32, #tpu.memory_space<vmem>>, vector<8x64xf32>
    %3 = arith.addf %2, %1 : vector<8x64xf32>
    %c0_3 = arith.constant 0 : index
    %c0_4 = arith.constant 0 : index
    %4 = vector.load %arg4[%c0_3, %c0_4] : memref<8x64xf32, #tpu.memory_space<vmem>>, vector<8x64xf32>
    tpu.vector_store %arg4[%c0_3, %c0_4], %3 {strides = array<i32>} : memref<8x64xf32, #tpu.memory_space<vmem>>, vector<8x64xf32>,
    return
  }
  func.func @transform_0(%arg0: i32, %arg1: memref<1xi32, #tpu.memory_space<smem>>) -> (i32, i32) {
    %c0_i32 = arith.constant 0 : i32
    %c0_i32_0 = arith.constant 0 : i32
    return %arg0, %c0_i32 : i32, i32
  }
  func.func @transform_1(%arg0: i32, %arg1: memref<1xi32, #tpu.memory_space<smem>>) -> (i32, i32) {
    %c0_i32 = arith.constant 0 : i32
    %c0_i32_0 = arith.constant 0 : i32
    return %arg0, %c0_i32 : i32, i32
  }
  func.func @transform_2(%arg0: i32, %arg1: memref<1xi32, #tpu.memory_space<smem>>) -> (i32, i32) {
    %c0_i32 = arith.constant 0 : i32
    %c0_i32_0 = arith.constant 0 : i32
    return %arg0, %c0_i32 : i32, i32
  }
}

</mosaic_0001>

<llo_original>
// kernel: tpu_custom_call.1
$region0: #{tpu_custom_call.1}
  #allocation0 [shape = 'u32[]', space=smem, size = 0x4, offset = 0x4, fixed_abs, tag = 'smem constant byte address 0x4 - core index']
  #allocation1 [shape = 'u32[144,128]{1,0:T(1,128)}', space=vmem, size = 0x12000, scoped, tag = 'internal scratch']
  #allocation2 [shape = 's32[1]{0}', space=sflag, size = 0x4, scoped, tag = 'scoped memory for tpu_custom_call.1']
  #allocation3 [shape = 's32[1]{0:T(128)S(6)}', space=smem, size = 0x200, scoped, tag = 'prefetched SMEM operand 0']
  %s0 = inlined_call_operand.<no memory space> [shape: s32[1], index: 0, kind: input, shape index: {}]
  %s1 = inlined_call_operand.hbm [shape: f32[8,64], index: 1, kind: input, shape index: {}]
  %s2 = inlined_call_operand.hbm [shape: f32[8,32], index: 2, kind: input, shape index: {}]
  %s3 = inlined_call_operand.hbm [shape: f32[8,64], index: 3, kind: output, shape index: {}]
  %s4 = sld [smem:[#allocation0]]
  $region26: #{tpu_custom_call.1} parent=0
    _
  %s6 = ssub.s32 1, %s4
  %s7 = scalar_select 0, %s6, %s4
  %8 = sst [smem:[#allocation3]] %s0
  $region1: #{tpu_custom_call.1} parent=0
    #allocation4 [shape = 'u8[4096]{0}', space=vmem, size = 0x1000, scoped, tag = 'input window, operand 1, single buffered']
    #allocation5 [shape = 's32[1]{0}', space=sflag, size = 0x4, scoped, tag = 'scoped memory for tpu_custom_call.1']
    #allocation6 [shape = 's32[1]{0}', space=sflag, size = 0x4, scoped, tag = 'scoped memory for tpu_custom_call.1']
    #allocation7 [shape = 'u8[4096]{0}', space=vmem, size = 0x1000, scoped, tag = 'input window, operand 2, single buffered']
    #allocation8 [shape = 's32[1]{0}', space=sflag, size = 0x4, scoped, tag = 'scoped memory for tpu_custom_call.1']
    #allocation9 [shape = 'u8[4096]{0}', space=vmem, size = 0x1000, scoped, tag = 'output window, operand 0, single buffered']
    %9 = vsyncpa [#allocation5], 0
    %10 = vsyncpa [#allocation8], 0
    %11 = vsyncpa [#allocation6], 0
    // Predicated region
    $region2: #{tpu_custom_call.1} parent=1 // pred_check
      _
    $region3: #{tpu_custom_call.1} parent=1 // pred_check_branch
      %13 = sbr.rel (0) target = $region5
    $region4: #{tpu_custom_call.1} parent=1 // pred_region
      %s15 = ssub.s32 128, 128
      %16 = vsyncadd [#allocation5], %s15
      %s18 = sshll.u32 [#allocation4], 4
      %s19 = int_to_ptr.vmem [resolvable:$true] %s18
      %21 = dma.hbm_to_vmem [thread:$0]  %s1, 128, %s19, [#allocation5]
    $region5: #{tpu_custom_call.1} parent=1 // pred_fallthru
      _
    // Predicated region
    $region6: #{tpu_custom_call.1} parent=1 // pred_check
      _
    $region7: #{tpu_custom_call.1} parent=1 // pred_check_branch
      %23 = sbr.rel (0) target = $region9
    $region8: #{tpu_custom_call.1} parent=1 // pred_region
      %s25 = ssub.s32 128, 128
      %26 = vsyncadd [#allocation8], %s25
      %s28 = sshll.u32 [#allocation7], 4
      %s29 = int_to_ptr.vmem [resolvable:$true] %s28
      %31 = dma.hbm_to_vmem [thread:$0]  %s2, 128, %s29, [#allocation8]
    $region9: #{tpu_custom_call.1} parent=1 // pred_fallthru
      _
    // Predicated region
    $region10: #{tpu_custom_call.1} parent=1 // pred_check
      _
    $region11: #{tpu_custom_call.1} parent=1 // pred_check_branch
      %33 = sbr.rel (0) target = $region13
    $region12: #{tpu_custom_call.1} parent=1 // pred_region
      %34 = dma.done [#allocation5], 128
    $region13: #{tpu_custom_call.1} parent=1 // pred_fallthru
      _
    // Predicated region
    $region14: #{tpu_custom_call.1} parent=1 // pred_check
      _
    $region15: #{tpu_custom_call.1} parent=1 // pred_check_branch
      %36 = sbr.rel (0) target = $region17
    $region16: #{tpu_custom_call.1} parent=1 // pred_region
      %37 = dma.done [#allocation8], 128
    $region17: #{tpu_custom_call.1} parent=1 // pred_fallthru
      _
    %v38 = vld [vmem:[#allocation7] sm:$0xff]
    %40 = vrot.lane.b32.xlu0 %v38, 32
    %v41 = vpop.permute.xlu0 %40
    %vm43 = vcmask 261120
    %v44 = vsel %vm43, %v38, %v41
    %v45 = vld [vmem:[#allocation4] sm:$0xff]
    %v46 = vadd.f32 %v45, %v44
    %vm47 = vcmask 523264
    %48 = vst.msk [vmem:[#allocation9] sm:$0xff] %vm47, %v46
    // Predicated region
    $region18: #{tpu_custom_call.1} parent=1 // pred_check
      _
    $region19: #{tpu_custom_call.1} parent=1 // pred_check_branch
      %50 = sbr.rel (0) target = $region21
    $region20: #{tpu_custom_call.1} parent=1 // pred_region
      %s52 = ssub.s32 128, 128
      %53 = vsyncadd [#allocation6], %s52
      %s55 = sshll.u32 [#allocation9], 4
      %s56 = int_to_ptr.vmem [resolvable:$true] %s55
      %58 = dma.vmem_to_hbm [thread:$0]  %s56, 128, %s3, [#allocation6]
    $region21: #{tpu_custom_call.1} parent=1 // pred_fallthru
      _
    // Predicated region
    $region22: #{tpu_custom_call.1} parent=1 // pred_check
      _
    $region23: #{tpu_custom_call.1} parent=1 // pred_check_branch
      %60 = sbr.rel (0) target = $region25
    $region24: #{tpu_custom_call.1} parent=1 // pred_region
      %61 = dma.done [#allocation6], 128
    $region25: #{tpu_custom_call.1} parent=1 // pred_fallthru
      _
    %62 = vsyncpa [#allocation5], 1
    %63 = vsyncpa [#allocation8], 1
    %64 = vsyncpa [#allocation6], 1

</llo_original>
